<compile_context>
chip_gen: v6e
topology: v6e:2x2x1
jax: 0.10.0
libtpu: 0.0.40
codegen_flags: <defaults>
</compile_context>

<pallas_src>
import math
import random
from functools import partial

import jax
import jax.numpy as jnp
from jax.experimental import pallas as pl
from jax.experimental.pallas import tpu as pltpu


def _affine_kernel(x_ref, g_ref, b_ref, o_ref):
    # x_ref/o_ref: (TR, TL) tile of the flattened (N*C, H*W) image.
    # g_ref/b_ref: (TR, 1) f32 per-row params, resident (constant index_map).
    x = x_ref[...].astype(jnp.float32)
    o_ref[...] = (x * g_ref[...] + b_ref[...]).astype(o_ref.dtype)


def _round_up(x, m):
    return ((x + m - 1) // m) * m


def _vmem_budget():
    """(per-block target bytes, vmem_limit_bytes), derived from the chip."""
    try:
        cap = pltpu.get_tpu_info().vmem_capacity_bytes
    except Exception:
        cap = 64 << 20                       # assume v7x (smallest VMEM) if unknown
    target = min(4 << 20, cap // 16)         # 2x(in+out) double-buffer << cap/2
    limit = min(32 << 20, cap // 2)
    return target, limit


def _choose_tiling(rows, lanes, itemsize, channels, target_bytes):
    """Pick (tr, tl) block shape for the (rows, lanes) view.

    tr is a multiple of lcm(sublane packing, C) (or the full row extent) so a
    single resident (tr, 1) gamma/beta pattern is valid for every row block.
    If one row-quantum already exceeds the block budget, the lane axis is
    tiled in multiples of 128 as well (2-D grid).
    """
    sub = max(8, 32 // itemsize)             # 8 f32 / 16 bf16 / 32 int8-fp8
    quant = (sub * channels) // math.gcd(sub, channels)   # lcm(sub, C)
    row_bytes = lanes * itemsize

    lane_tileable = (lanes % 128 == 0) and (lanes > 128)
    if quant * row_bytes > target_bytes and lane_tileable:
        # 2-D tiling: one row-quantum per block, lane axis split in 128s.
        tr = rows if rows <= quant else quant
        tl = (target_bytes // (tr * itemsize)) // 128 * 128
        tl = min(lanes, max(128, tl))
        return tr, tl

    # Row-only tiling, full lane width.
    # TODO(synk): if lanes % 128 != 0 on a huge image, blocks may exceed the
    # target budget here; typical GAN resolutions (H*W multiple of 128) are fine.
    tl = lanes
    if rows <= quant:
        return rows, tl                      # block == full dim (always legal)
    tr = max(quant, min((target_bytes // row_bytes) // quant * quant,
                        (rows // quant) * quant))
    # Megacore: guarantee >=2 row blocks so both v7x TensorCores stream.
    if rows >= 2 * quant and pl.cdiv(rows, tr) < 2:
        tr = min(_round_up(pl.cdiv(rows, 2), quant), (rows // quant) * quant)
    return tr, tl


@partial(jax.jit, static_argnames=("donate",))
def _apply_affine(x, gamma, beta, donate=False):
    """fn(x): per-channel affine, tiled & pipelined over (N*C, H*W)."""
    N, C, H, W = x.shape
    rows, lanes = N * C, H * W
    xf = x.reshape(rows, lanes)

    target_bytes, vmem_limit = _vmem_budget()
    tr, tl = _choose_tiling(rows, lanes, x.dtype.itemsize, C, target_bytes)
    grid = (pl.cdiv(rows, tr), pl.cdiv(lanes, tl))

    # Tiny resident per-row-block parameter pattern: tr is always a multiple of
    # C, so the same (tr, 1) slab is valid for every row block (constant
    # index_map => DMA'd once). Kept in f32 so bf16 inputs compute in f32.
    reps = tr // C
    g = jnp.tile(gamma.astype(jnp.float32), reps).reshape(tr, 1)
    b = jnp.tile(beta.astype(jnp.float32), reps).reshape(tr, 1)

    out = pl.pallas_call(
        _affine_kernel,
        out_shape=jax.ShapeDtypeStruct((rows, lanes), x.dtype),
        grid=grid,
        in_specs=[
            pl.BlockSpec((tr, tl), lambda i, j: (i, j)),
            pl.BlockSpec((tr, 1), lambda i, j: (0, 0)),
            pl.BlockSpec((tr, 1), lambda i, j: (0, 0)),
        ],
        out_specs=pl.BlockSpec((tr, tl), lambda i, j: (i, j)),
        # Only alias when the caller actually donates x; otherwise XLA would
        # insert a hidden defensive copy that doubles HBM traffic.
        input_output_aliases=({0: 0} if donate else {}),
        compiler_params=pltpu.CompilerParams(
            dimension_semantics=("parallel", "parallel"),
            vmem_limit_bytes=vmem_limit,
        ),
    )(xf, g, b)
    return out.reshape(N, C, H, W)


def random_apply(x, gamma, beta, prob, rng=random, donate=False):
    """Pallas port of RandomApply(prob, fn=per-channel affine, fn_else=identity).

    The coin flip is a host-side Python random() call exactly as in the
    PyTorch forward; the identity branch returns x without launching a kernel.
    """
    if rng.random() < prob:
        return _apply_affine(x, gamma, beta, donate=donate)   # fn
    return x                                                  # fn_else: identity


if __name__ == "__main__":
    key = jax.random.PRNGKey(0)
    N, C, H, W = 2, 4, 16, 16
    x = jax.random.normal(key, (N, C, H, W), dtype=jnp.float32)

    # Deterministic "parameters" of fn (synthetic, no checkpoint load).
    gamma = 1.0 + 0.1 * jnp.arange(C, dtype=jnp.float32)
    beta = 0.01 * jnp.arange(C, dtype=jnp.float32)
    ref = x * gamma.reshape(1, C, 1, 1) + beta.reshape(1, C, 1, 1)

    random.seed(0)

    # prob=1.0 -> fn branch (runs the Pallas kernel).
    y_fn = random_apply(x, gamma, beta, prob=1.0)
    jax.block_until_ready(y_fn)
    assert jnp.allclose(y_fn, ref, atol=1e-6), "mismatch vs affine reference"

    # prob=0.0 -> identity branch (kernel elided entirely on the host).
    y_id = random_apply(x, gamma, beta, prob=0.0)
    assert y_id is x, "identity branch should return x untouched"

    # Partial last row block (rows=12, tr=8) exercises the cdiv grid + resident
    # param pattern across a masked boundary block.
    x2 = jax.random.normal(jax.random.PRNGKey(1), (3, C, H, W), dtype=jnp.float32)
    y2 = _apply_affine(x2, gamma, beta)
    jax.block_until_ready(y2)
    ref2 = x2 * gamma.reshape(1, C, 1, 1) + beta.reshape(1, C, 1, 1)
    assert jnp.allclose(y2, ref2, atol=1e-6), "partial-block mismatch"

    # bf16 input: affine computed in f32, cast back on store.
    y_bf = _apply_affine(x.astype(jnp.bfloat16), gamma, beta)
    jax.block_until_ready(y_bf)
    assert jnp.allclose(y_bf.astype(jnp.float32), ref, atol=5e-2, rtol=5e-2), \
        "bf16 path mismatch"

    # Tiler sanity at a large resolution (pure Python, no kernel launch):
    # 1024x1024 f32, C=3 -> lane axis must split, blocks stay within budget.
    tr_big, tl_big = _choose_tiling(16 * 3, 1024 * 1024, 4, 3, 4 << 20)
    assert tr_big * tl_big * 4 <= (4 << 20), "block exceeds budget at 1024x1024"
    assert tl_big % 128 == 0 and tr_big % 3 == 0, "misaligned large-image tiling"

    # The actual stochastic RandomApply behaviour (prob=0.5).
    y = random_apply(x, gamma, beta, prob=0.5)
    jax.block_until_ready(y)

    print("KERNEL_OK")
</pallas_src>

<mosaic_0001>
module attributes {stable_mosaic.version = 11 : i64} {
  func.func @_affine_kernel(%arg0: i32, %arg1: i32, %arg2: memref<8x256xf32, #tpu.memory_space<vmem>>, %arg3: memref<8x1xf32, #tpu.memory_space<vmem>>, %arg4: memref<8x1xf32, #tpu.memory_space<vmem>>, %arg5: memref<8x256xf32, #tpu.memory_space<vmem>>) attributes {dimension_semantics = [#tpu.dimension_semantics<parallel>, #tpu.dimension_semantics<parallel>], iteration_bounds = array<i64: 1, 1>, scalar_prefetch = 0 : i64, scratch_operands = 0 : i64, tpu.core_type = #tpu.core_type<tc>, window_params = [{transform_indices = @transform_0, window_bounds = array<i64: 8, 256>}, {pipeline_mode = #tpu.pipeline_mode<synchronous>, transform_indices = @transform_1, window_bounds = array<i64: 8, 1>}, {pipeline_mode = #tpu.pipeline_mode<synchronous>, transform_indices = @transform_2, window_bounds = array<i64: 8, 1>}, {transform_indices = @transform_3, window_bounds = array<i64: 8, 256>}]} {
    %c0 = arith.constant 0 : index
    %c0_0 = arith.constant 0 : index
    %0 = vector.load %arg2[%c0, %c0_0] : memref<8x256xf32, #tpu.memory_space<vmem>>, vector<8x256xf32>
    %c0_1 = arith.constant 0 : index
    %c0_2 = arith.constant 0 : index
    %1 = vector.load %arg3[%c0_1, %c0_2] : memref<8x1xf32, #tpu.memory_space<vmem>>, vector<8x1xf32>
    %2 = vector.broadcast %1 : vector<8x1xf32> to vector<8x256xf32>
    %3 = arith.mulf %0, %2 : vector<8x256xf32>
    %c0_3 = arith.constant 0 : index
    %c0_4 = arith.constant 0 : index
    %4 = vector.load %arg4[%c0_3, %c0_4] : memref<8x1xf32, #tpu.memory_space<vmem>>, vector<8x1xf32>
    %5 = vector.broadcast %4 : vector<8x1xf32> to vector<8x256xf32>
    %6 = arith.addf %3, %5 : vector<8x256xf32>
    %c0_5 = arith.constant 0 : index
    %c0_6 = arith.constant 0 : index
    %7 = vector.load %arg5[%c0_5, %c0_6] : memref<8x256xf32, #tpu.memory_space<vmem>>, vector<8x256xf32>
    tpu.vector_store %arg5[%c0_5, %c0_6], %6 {strides = array<i32>} : memref<8x256xf32, #tpu.memory_space<vmem>>, vector<8x256xf32>,
    return
  }
  func.func @transform_0(%arg0: i32, %arg1: i32) -> (i32, i32) {
    %c0_i32 = arith.constant 0 : i32
    return %arg0, %arg1 : i32, i32
  }
  func.func @transform_1(%arg0: i32, %arg1: i32) -> (i32, i32) {
    %c0_i32 = arith.constant 0 : i32
    %c0_i32_0 = arith.constant 0 : i32
    %c0_i32_1 = arith.constant 0 : i32
    return %c0_i32, %c0_i32_0 : i32, i32
  }
  func.func @transform_2(%arg0: i32, %arg1: i32) -> (i32, i32) {
    %c0_i32 = arith.constant 0 : i32
    %c0_i32_0 = arith.constant 0 : i32
    %c0_i32_1 = arith.constant 0 : i32
    return %c0_i32, %c0_i32_0 : i32, i32
  }
  func.func @transform_3(%arg0: i32, %arg1: i32) -> (i32, i32) {
    %c0_i32 = arith.constant 0 : i32
    return %arg0, %arg1 : i32, i32
  }
}

</mosaic_0001>

<llo_original>
// kernel: tile.1
$region0: #{tile.1}
  %s0 = inlined_call_operand.vmem [shape: f32[2,4], index: 0, kind: input, shape index: {}]
  %s1 = inlined_call_operand.vmem [shape: f32[8,1], index: 1, kind: output, shape index: {}]
  $region1: #{tile.1} parent=0
    #allocation0 [shape = 'u8[4096]{0}', space=vmem, size = 0x1000, scoped, tag = 'scoped mem for input reshape']
    %s3 = sshll.u32 1, 2
    %s4 = ssub.s32 %s3, 1
    %v5 = vld [vmem:[%s0] sm:%s4]
    %6 = vst [vmem:[#allocation0] sm:%s4] %v5
    %v7 = vld [vmem:[#allocation0] sm:$0x3]
    %vm8 = vcmask 7168
    %9 = vst.msk [vmem:[%s1] ss:$4 sm:$0x3] %vm8, %v7
    %v10 = vld [vmem:[#allocation0] sm:$0x3]
    %11 = vrot.lane.b32.xlu0 %v10, 127
    %v12 = vpop.permute.xlu0 %11
    %vm13 = vcmask 7168
    %s14 = scalar_lea.vmem %s1, 1
    %15 = vst.msk [vmem:[%s14] ss:$4 sm:$0x3] %vm13, %v12
    %v16 = vld [vmem:[#allocation0] sm:$0x3]
    %17 = vrot.lane.b32.xlu0 %v16, 126
    %v18 = vpop.permute.xlu0 %17
    %vm19 = vcmask 7168
    %s20 = scalar_lea.vmem %s1, 2
    %21 = vst.msk [vmem:[%s20] ss:$4 sm:$0x3] %vm19, %v18
    %v22 = vld [vmem:[#allocation0] sm:$0x3]
    %23 = vrot.lane.b32.xlu0 %v22, 125
    %v24 = vpop.permute.xlu0 %23
    %vm25 = vcmask 7168
    %s26 = scalar_lea.vmem %s1, 3
    %27 = vst.msk [vmem:[%s26] ss:$4 sm:$0x3] %vm25, %v24

// kernel: tile.13
$region0: #{tile.13}
  #allocation0 [shape = 's32[1]{0}', space=sflag, size = 0x4, scoped, tag = 'scoped memory for tile.13']
  %s0 = inlined_call_operand.vmem [shape: f32[4], index: 0, kind: input, shape index: {}]
  %s1 = inlined_call_operand.vmem [shape: f32[2,4], index: 1, kind: output, shape index: {}]
  // Predicated region
  $region2: #{tile.13} parent=0 // pred_check
    _
  $region3: #{tile.13} parent=0 // pred_check_branch
    %3 = sbr.rel (0) target = $region5
  $region4: #{tile.13} parent=0 // pred_region
    _
  $region5: #{tile.13} parent=0 // pred_fallthru
    _
  %v4 = vld [vmem:[%s0] ss:$0 sm:$0xff]
  %5 = vst [vmem:[%s1] sm:$0x3] %v4

// kernel: _apply_affine.1
$region0: #{_apply_affine.1}
  #allocation0 [shape = 'u32[]', space=smem, size = 0x4, offset = 0x4, fixed_abs, tag = 'smem constant byte address 0x4 - core index']
  #allocation1 [shape = 'u32[144,128]{1,0:T(1,128)}', space=vmem, size = 0x12000, scoped, tag = 'internal scratch']
  %s0 = inlined_call_operand.vmem [shape: f32[8,256], index: 0, kind: input, shape index: {}]
  %s1 = inlined_call_operand.vmem [shape: f32[8,1], index: 1, kind: input, shape index: {}]
  %s2 = inlined_call_operand.vmem [shape: f32[8,1], index: 2, kind: input, shape index: {}]
  %s3 = inlined_call_operand.vmem [shape: f32[8,256], index: 3, kind: output, shape index: {}]
  %s4 = sld [smem:[#allocation0]]
  $region22: #{_apply_affine.1} parent=0
    _
  %s6 = ssub.s32 1, %s4
  %s7 = scalar_select 0, %s6, %s4
  // Predicated region
  $region2: #{_apply_affine.1} parent=0 // pred_check
    _
  $region3: #{_apply_affine.1} parent=0 // pred_check_branch
    %9 = sbr.rel (0) target = $region5
  $region4: #{_apply_affine.1} parent=0 // pred_region
    _
  $region5: #{_apply_affine.1} parent=0 // pred_fallthru
    _
  // Predicated region
  $region6: #{_apply_affine.1} parent=0 // pred_check
    _
  $region7: #{_apply_affine.1} parent=0 // pred_check_branch
    %11 = sbr.rel (0) target = $region9
  $region8: #{_apply_affine.1} parent=0 // pred_region
    _
  $region9: #{_apply_affine.1} parent=0 // pred_fallthru
    _
  // Predicated region
  $region10: #{_apply_affine.1} parent=0 // pred_check
    _
  $region11: #{_apply_affine.1} parent=0 // pred_check_branch
    %13 = sbr.rel (0) target = $region13
  $region12: #{_apply_affine.1} parent=0 // pred_region
    _
  $region13: #{_apply_affine.1} parent=0 // pred_fallthru
    _
  %v14 = vld [vmem:[%s0] sm:$0xff]
  %v15 = vld [vmem:[%s0 + $0x8] sm:$0xff]
  %v16 = vld [vmem:[%s1] sm:$0xff]
  %18 = vset.pattern.permute.xlu0 0
  %19 = vperm.xlu0 %18, %v16
  %v20 = vpop.permute.xlu0 %19
  %v22 = vmul.f32 %v14, %v20
  %v23 = vmul.f32 %v15, %v20
  %v24 = vld [vmem:[%s2] sm:$0xff]
  %26 = vset.pattern.permute.xlu0 0
  %27 = vperm.xlu0 %26, %v24
  %v28 = vpop.permute.xlu0 %27
  %v30 = vadd.f32 %v22, %v28
  %v31 = vadd.f32 %v23, %v28
  %32 = vst [vmem:[%s3] sm:$0xff] %v30
  %33 = vst [vmem:[%s3 + $0x8] sm:$0xff] %v31
  // Predicated region
  $region14: #{_apply_affine.1} parent=0 // pred_check
    _
  $region15: #{_apply_affine.1} parent=0 // pred_check_branch
    %35 = sbr.rel (0) target = $region17
  $region16: #{_apply_affine.1} parent=0 // pred_region
    _
  $region17: #{_apply_affine.1} parent=0 // pred_fallthru
    _
  // Predicated region
  $region18: #{_apply_affine.1} parent=0 // pred_check
    _
  $region19: #{_apply_affine.1} parent=0 // pred_check_branch
    %37 = sbr.rel (0) target = $region21
  $region20: #{_apply_affine.1} parent=0 // pred_region
    _
  $region21: #{_apply_affine.1} parent=0 // pred_fallthru
    _

</llo_original>
